<compile_context>
chip_gen: v7x
topology: tpu7x:2x2x1
jax: 0.10.0
libtpu: 0.0.40
codegen_flags: <defaults>
</compile_context>

<pallas_src>
import jax
import jax.numpy as jnp
from jax.experimental import pallas as pl
from jax.experimental.pallas import tpu as pltpu

# ---- model hyper-params (the "args" of the PyTorch module) ------------------
NUM_CLASSES = 8             # args.num_classes
HIDDEN_DIM = 32             # hidden_dim
SOFTPLUS_BETA = 1.0         # args.softplus_beta
SOFTPLUS_THRESHOLD = 20.0   # nn.Softplus default threshold

_TILE_B = 256               # batch tile for the pipelined large-batch path (multiple of 8)

# ---- Lanczos lgamma (g=7, 9 coefficients), valid for z > 0.5 -----------------
# alpha = softplus(.) + 1 + 1/K > 1.125, so this branch is sufficient.
_LANCZOS_G = 7.0
_LANCZOS_COEFS = (
    0.99999999999980993,
    676.5203681218851,
    -1259.1392167224028,
    771.32342877765313,
    -176.61502916214059,
    12.507343278686905,
    -0.13857109526572012,
    9.9843695780195716e-6,
    1.5056327351493116e-7,
)
_HALF_LOG_2PI = 0.9189385332046727  # 0.5 * log(2*pi)


def _recip(x):
    """1/x via EUP approx reciprocal + one Newton step (keeps divides off the VALU)."""
    r = pl.reciprocal(x, approx=True)
    return r * (2.0 - x * r)


def _softplus(x):
    """PyTorch nn.Softplus(beta, threshold=20) semantics (beta folded out when == 1)."""
    bx = SOFTPLUS_BETA * x
    safe_bx = jnp.minimum(bx, SOFTPLUS_THRESHOLD)
    sp = jnp.log(1.0 + jnp.exp(safe_bx))
    if SOFTPLUS_BETA != 1.0:
        sp = sp / SOFTPLUS_BETA
    return jnp.where(bx > SOFTPLUS_THRESHOLD, x, sp)


def _lgamma(z):
    """Lanczos approximation of log(Gamma(z)) for z > 0.5 using VPU/EUP ops only."""
    zm1 = z - 1.0
    acc = jnp.full_like(z, _LANCZOS_COEFS[0])
    for i in range(1, len(_LANCZOS_COEFS)):
        acc = acc + _LANCZOS_COEFS[i] * _recip(zm1 + float(i))
    t = zm1 + _LANCZOS_G + 0.5
    return _HALF_LOG_2PI + (zm1 + 0.5) * jnp.log(t) - t + jnp.log(acc)


# ---- Pallas kernel -----------------------------------------------------------
def cvae_kernel(xa_ref, yu_ref, wx_ref, wy_ref, out_ref):
    K = NUM_CLASSES
    x = xa_ref[...]          # (TB, H+1)  last column is ones (bias fold)
    y = yu_ref[0]            # (TB, K)    ytilde
    u = yu_ref[1]            # (TB, K)    uniform [0,1) noise (torch.rand_like)

    # Fused x-path: one matmul yields encoder + decoder x-contributions
    # (biases included via the ones column).                       (TB, 2K)
    xw = jnp.dot(x, wx_ref[...], preferred_element_type=jnp.float32)

    # Encoder pre-activation in lanes [0,K); lanes [K,2K) keep the decoder's
    # x-contribution untouched (wy[0] = [We_y | 0]).
    s = xw + jnp.dot(y, wy_ref[0], preferred_element_type=jnp.float32)

    alpha_wide = _softplus(s) + (1.0 + 1.0 / K)   # only lanes [0,K) are meaningful
    alpha = alpha_wide[:, :K]                     # prefix (offset-0) lane slice

    # Reparameterize: z = exp( (log(u*alpha) + lgamma(alpha)) / alpha )
    inv_alpha = _recip(alpha)
    z = jnp.exp((jnp.log(u * alpha) + _lgamma(alpha)) * inv_alpha)

    # Decoder: wy[1] = [0 | Wd_y] adds z @ Wd_y into lanes [K,2K).
    final = s + jnp.dot(z, wy_ref[1], preferred_element_type=jnp.float32)

    # Assemble the packed output [alpha | y_tilde] and store once, lane-contiguously.
    lane = jax.lax.broadcasted_iota(jnp.int32, final.shape, dimension=1)
    out_ref[...] = jnp.where(lane < K, alpha_wide, final)


# ---- wrapper -----------------------------------------------------------------
def _pack_inputs(x, ytilde, u, we, be, wd, bd):
    """Pack 7 module operands into 4 kernel operands (done outside the kernel)."""
    B, H = x.shape
    K = NUM_CLASSES
    x_aug = jnp.concatenate([x, jnp.ones((B, 1), dtype=x.dtype)], axis=1)      # (B, H+1)
    yu = jnp.stack([ytilde, u], axis=0)                                        # (2, B, K)
    w_x = jnp.concatenate(
        [jnp.concatenate([we[:H], wd[:H]], axis=1),                            # (H, 2K)
         jnp.concatenate([be[None, :], bd[None, :]], axis=1)],                 # (1, 2K)
        axis=0)                                                                # (H+1, 2K)
    zero = jnp.zeros((K, K), dtype=we.dtype)
    w_y = jnp.stack(
        [jnp.concatenate([we[H:], zero], axis=1),                              # [We_y | 0]
         jnp.concatenate([zero, wd[H:]], axis=1)],                             # [0 | Wd_y]
        axis=0)                                                                # (2, K, 2K)
    return x_aug, yu, w_x, w_y


@jax.jit
def text_cvae_forward(x, ytilde, u, we, be, wd, bd):
    B = x.shape[0]
    K = NUM_CLASSES
    x_aug, yu, w_x, w_y = _pack_inputs(x, ytilde, u, we, be, wd, bd)
    out_shape = jax.ShapeDtypeStruct((B, 2 * K), jnp.float32)

    if B % _TILE_B == 0 and B // _TILE_B >= 2:
        # Large batch: tile over B, keep (tiny) weights resident, shard the batch
        # axis across TensorCores ("parallel" uses both TCs on v7x).
        f = pl.pallas_call(
            cvae_kernel,
            out_shape=out_shape,
            grid=(B // _TILE_B,),
            in_specs=[
                pl.BlockSpec((_TILE_B, x_aug.shape[1]), lambda i: (i, 0)),
                pl.BlockSpec((2, _TILE_B, K), lambda i: (0, i, 0)),
                pl.BlockSpec(w_x.shape, lambda i: (0, 0)),
                pl.BlockSpec(w_y.shape, lambda i: (0, 0, 0)),
            ],
            out_specs=pl.BlockSpec((_TILE_B, 2 * K), lambda i: (i, 0)),
            compiler_params=pltpu.CompilerParams(
                dimension_semantics=("parallel",)),
        )
    else:
        # Small batch: grid-less call, whole arrays resident in VMEM
        # (no degenerate 1-step software pipeline).
        vmem = pl.BlockSpec(memory_space=pltpu.MemorySpace.VMEM)
        f = pl.pallas_call(
            cvae_kernel,
            out_shape=out_shape,
            in_specs=[vmem, vmem, vmem, vmem],
            out_specs=vmem,
        )

    out = f(x_aug, yu, w_x, w_y)          # (B, 2K) = [alpha | y_tilde]
    alpha = out[:, :K]
    y_tilde = out[:, K:]
    return y_tilde, alpha


# ---- pure-JAX reference (correctness check) -----------------------------------
def reference_forward(x, ytilde, u, we, be, wd, bd):
    pre = jnp.concatenate([x, ytilde], axis=1) @ we + be
    bx = SOFTPLUS_BETA * pre
    sp = jnp.log1p(jnp.exp(jnp.minimum(bx, SOFTPLUS_THRESHOLD))) / SOFTPLUS_BETA
    alpha = jnp.where(bx > SOFTPLUS_THRESHOLD, pre, sp) + 1.0 + 1.0 / NUM_CLASSES
    z = jnp.exp((jnp.log(u * alpha) + jax.scipy.special.gammaln(alpha)) / alpha)
    y_tilde = jnp.concatenate([x, z], axis=1) @ wd + bd
    return y_tilde, alpha


if __name__ == "__main__":
    K, H = NUM_CLASSES, HIDDEN_DIM
    key = jax.random.PRNGKey(0)
    kw1, kb1, kw2, kb2, kdata = jax.random.split(key, 5)

    # Linear(H+K, K) params stored as (in_features, out_features); bias (K,)
    scale = (H + K) ** -0.5
    we = jax.random.uniform(kw1, (H + K, K), jnp.float32, -scale, scale)
    be = jax.random.uniform(kb1, (K,), jnp.float32, -scale, scale)
    wd = jax.random.uniform(kw2, (H + K, K), jnp.float32, -scale, scale)
    bd = jax.random.uniform(kb2, (K,), jnp.float32, -scale, scale)

    def make_inputs(b, k):
        kx, ky, ku = jax.random.split(k, 3)
        x = jax.random.normal(kx, (b, H), jnp.float32)
        ytilde = jax.nn.softmax(jax.random.normal(ky, (b, K), jnp.float32), axis=-1)
        # torch.rand_like noise made an explicit input; clamped away from 0 so
        # log(u*alpha) stays finite (torch itself allows u == 0 -> z == 0).
        u = jax.random.uniform(ku, (b, K), jnp.float32, minval=1e-6, maxval=1.0)
        return x, ytilde, u

    ok = True
    for b in (8, 512):  # b=8 -> grid-less VMEM path; b=512 -> batch-tiled "parallel" path
        x, ytilde, u = make_inputs(b, jax.random.fold_in(kdata, b))
        y_tilde, alpha = text_cvae_forward(x, ytilde, u, we, be, wd, bd)
        jax.block_until_ready((y_tilde, alpha))
        y_ref, a_ref = reference_forward(x, ytilde, u, we, be, wd, bd)
        assert y_tilde.shape == (b, K) and alpha.shape == (b, K)
        ok &= bool(jnp.allclose(alpha, a_ref, rtol=2e-3, atol=2e-3))
        ok &= bool(jnp.allclose(y_tilde, y_ref, rtol=2e-3, atol=2e-3))

    assert ok
    print("KERNEL_OK")
</pallas_src>

<mosaic_0001>
module attributes {stable_mosaic.version = 11 : i64} {
  func.func @cvae_kernel(%arg0: memref<8x33xf32, #tpu.memory_space<vmem>>, %arg1: memref<2x8x8xf32, #tpu.memory_space<vmem>>, %arg2: memref<33x16xf32, #tpu.memory_space<vmem>>, %arg3: memref<2x8x16xf32, #tpu.memory_space<vmem>>, %arg4: memref<8x16xf32, #tpu.memory_space<vmem>>) attributes {dimension_semantics = [], scalar_prefetch = 0 : i64, scratch_operands = 0 : i64, tpu.core_type = #tpu.core_type<tc>} {
    %c0 = arith.constant 0 : index
    %c0_0 = arith.constant 0 : index
    %0 = vector.load %arg0[%c0, %c0_0] : memref<8x33xf32, #tpu.memory_space<vmem>>, vector<8x33xf32>
    %c0_1 = arith.constant 0 : index
    %c0_2 = arith.constant 0 : index
    %c0_3 = arith.constant 0 : index
    %1 = vector.load %arg1[%c0_1, %c0_2, %c0_3] : memref<2x8x8xf32, #tpu.memory_space<vmem>>, vector<1x8x8xf32>
    %2 = vector.shape_cast %1 : vector<1x8x8xf32> to vector<8x8xf32>
    %c1 = arith.constant 1 : index
    %c0_4 = arith.constant 0 : index
    %c0_5 = arith.constant 0 : index
    %3 = vector.load %arg1[%c1, %c0_4, %c0_5] : memref<2x8x8xf32, #tpu.memory_space<vmem>>, vector<1x8x8xf32>
    %4 = vector.shape_cast %3 : vector<1x8x8xf32> to vector<8x8xf32>
    %c0_6 = arith.constant 0 : index
    %c0_7 = arith.constant 0 : index
    %5 = vector.load %arg2[%c0_6, %c0_7] : memref<33x16xf32, #tpu.memory_space<vmem>>, vector<33x16xf32>
    %cst = arith.constant dense<0.000000e+00> : vector<8x16xf32>
    %6 = tpu.matmul %0, %5, %cst {dimension_numbers = #tpu.dot_dimension_numbers<[1], [0], [0], [1], [0, 0, 1, 1], [], []>} : vector<8x33xf32>, vector<33x16xf32>, vector<8x16xf32> -> vector<8x16xf32>
    %c0_8 = arith.constant 0 : index
    %c0_9 = arith.constant 0 : index
    %c0_10 = arith.constant 0 : index
    %7 = vector.load %arg3[%c0_8, %c0_9, %c0_10] : memref<2x8x16xf32, #tpu.memory_space<vmem>>, vector<1x8x16xf32>
    %8 = vector.shape_cast %7 : vector<1x8x16xf32> to vector<8x16xf32>
    %cst_11 = arith.constant dense<0.000000e+00> : vector<8x16xf32>
    %9 = tpu.matmul %2, %8, %cst_11 {dimension_numbers = #tpu.dot_dimension_numbers<[1], [0], [0], [1], [0, 0, 1, 1], [], []>} : vector<8x8xf32>, vector<8x16xf32>, vector<8x16xf32> -> vector<8x16xf32>
    %10 = arith.addf %6, %9 : vector<8x16xf32>
    %cst_12 = arith.constant 1.000000e+00 : f32
    %11 = vector.broadcast %cst_12 : f32 to vector<8x16xf32>
    %12 = arith.mulf %11, %10 : vector<8x16xf32>
    %cst_13 = arith.constant 2.000000e+01 : f32
    %13 = vector.broadcast %cst_13 : f32 to vector<8x16xf32>
    %14 = arith.minimumf %12, %13 : vector<8x16xf32>
    %15 = math.exp %14 : vector<8x16xf32>
    %cst_14 = arith.constant 1.000000e+00 : f32
    %16 = vector.broadcast %cst_14 : f32 to vector<8x16xf32>
    %17 = arith.addf %16, %15 : vector<8x16xf32>
    %18 = math.log %17 : vector<8x16xf32>
    %cst_15 = arith.constant 2.000000e+01 : f32
    %19 = vector.broadcast %cst_15 : f32 to vector<8x16xf32>
    %20 = arith.cmpf ogt, %12, %19 : vector<8x16xf32>
    %21 = arith.select %20, %10, %18 : vector<8x16xi1>, vector<8x16xf32>
    %cst_16 = arith.constant 1.125000e+00 : f32
    %22 = vector.broadcast %cst_16 : f32 to vector<8x16xf32>
    %23 = arith.addf %21, %22 : vector<8x16xf32>
    %24 = vector.extract_strided_slice %23 {offsets = [0, 0], sizes = [8, 8], strides = [1, 1]} : vector<8x16xf32> to vector<8x8xf32>
    %25 = tpu.reciprocal %24 {approx = true} : vector<8x8xf32> -> vector<8x8xf32>
    %26 = arith.mulf %24, %25 : vector<8x8xf32>
    %cst_17 = arith.constant 2.000000e+00 : f32
    %27 = vector.broadcast %cst_17 : f32 to vector<8x8xf32>
    %28 = arith.subf %27, %26 : vector<8x8xf32>
    %29 = arith.mulf %25, %28 : vector<8x8xf32>
    %30 = arith.mulf %4, %24 : vector<8x8xf32>
    %31 = math.log %30 : vector<8x8xf32>
    %cst_18 = arith.constant 1.000000e+00 : f32
    %32 = vector.broadcast %cst_18 : f32 to vector<8x8xf32>
    %33 = arith.subf %24, %32 : vector<8x8xf32>
    %cst_19 = arith.constant 1.000000e+00 : f32
    %34 = vector.broadcast %cst_19 : f32 to vector<8x8xf32>
    %cst_20 = arith.constant 1.000000e+00 : f32
    %35 = vector.broadcast %cst_20 : f32 to vector<8x8xf32>
    %36 = arith.addf %33, %35 : vector<8x8xf32>
    %37 = tpu.reciprocal %36 {approx = true} : vector<8x8xf32> -> vector<8x8xf32>
    %38 = arith.mulf %36, %37 : vector<8x8xf32>
    %cst_21 = arith.constant 2.000000e+00 : f32
    %39 = vector.broadcast %cst_21 : f32 to vector<8x8xf32>
    %40 = arith.subf %39, %38 : vector<8x8xf32>
    %41 = arith.mulf %37, %40 : vector<8x8xf32>
    %cst_22 = arith.constant 676.520386 : f32
    %42 = vector.broadcast %cst_22 : f32 to vector<8x8xf32>
    %43 = arith.mulf %42, %41 : vector<8x8xf32>
    %44 = arith.addf %34, %43 : vector<8x8xf32>
    %cst_23 = arith.constant 2.000000e+00 : f32
    %45 = vector.broadcast %cst_23 : f32 to vector<8x8xf32>
    %46 = arith.addf %33, %45 : vector<8x8xf32>
    %47 = tpu.reciprocal %46 {approx = true} : vector<8x8xf32> -> vector<8x8xf32>
    %48 = arith.mulf %46, %47 : vector<8x8xf32>
    %cst_24 = arith.constant 2.000000e+00 : f32
    %49 = vector.broadcast %cst_24 : f32 to vector<8x8xf32>
    %50 = arith.subf %49, %48 : vector<8x8xf32>
    %51 = arith.mulf %47, %50 : vector<8x8xf32>
    %cst_25 = arith.constant -1259.13916 : f32
    %52 = vector.broadcast %cst_25 : f32 to vector<8x8xf32>
    %53 = arith.mulf %52, %51 : vector<8x8xf32>
    %54 = arith.addf %44, %53 : vector<8x8xf32>
    %cst_26 = arith.constant 3.000000e+00 : f32
    %55 = vector.broadcast %cst_26 : f32 to vector<8x8xf32>
    %56 = arith.addf %33, %55 : vector<8x8xf32>
    %57 = tpu.reciprocal %56 {approx = true} : vector<8x8xf32> -> vector<8x8xf32>
    %58 = arith.mulf %56, %57 : vector<8x8xf32>
    %cst_27 = arith.constant 2.000000e+00 : f32
    %59 = vector.broadcast %cst_27 : f32 to vector<8x8xf32>
    %60 = arith.subf %59, %58 : vector<8x8xf32>
    %61 = arith.mulf %57, %60 : vector<8x8xf32>
    %cst_28 = arith.constant 771.323425 : f32
    %62 = vector.broadcast %cst_28 : f32 to vector<8x8xf32>
    %63 = arith.mulf %62, %61 : vector<8x8xf32>
    %64 = arith.addf %54, %63 : vector<8x8xf32>
    %cst_29 = arith.constant 4.000000e+00 : f32
    %65 = vector.broadcast %cst_29 : f32 to vector<8x8xf32>
    %66 = arith.addf %33, %65 : vector<8x8xf32>
    %67 = tpu.reciprocal %66 {approx = true} : vector<8x8xf32> -> vector<8x8xf32>
    %68 = arith.mulf %66, %67 : vector<8x8xf32>
    %cst_30 = arith.constant 2.000000e+00 : f32
    %69 = vector.broadcast %cst_30 : f32 to vector<8x8xf32>
    %70 = arith.subf %69, %68 : vector<8x8xf32>
    %71 = arith.mulf %67, %70 : vector<8x8xf32>
    %cst_31 = arith.constant -176.615036 : f32
    %72 = vector.broadcast %cst_31 : f32 to vector<8x8xf32>
    %73 = arith.mulf %72, %71 : vector<8x8xf32>
    %74 = arith.addf %64, %73 : vector<8x8xf32>
    %cst_32 = arith.constant 5.000000e+00 : f32
    %75 = vector.broadcast %cst_32 : f32 to vector<8x8xf32>
    %76 = arith.addf %33, %75 : vector<8x8xf32>
    %77 = tpu.reciprocal %76 {approx = true} : vector<8x8xf32> -> vector<8x8xf32>
    %78 = arith.mulf %76, %77 : vector<8x8xf32>
    %cst_33 = arith.constant 2.000000e+00 : f32
    %79 = vector.broadcast %cst_33 : f32 to vector<8x8xf32>
    %80 = arith.subf %79, %78 : vector<8x8xf32>
    %81 = arith.mulf %77, %80 : vector<8x8xf32>
    %cst_34 = arith.constant 12.5073433 : f32
    %82 = vector.broadcast %cst_34 : f32 to vector<8x8xf32>
    %83 = arith.mulf %82, %81 : vector<8x8xf32>
    %84 = arith.addf %74, %83 : vector<8x8xf32>
    %cst_35 = arith.constant 6.000000e+00 : f32
    %85 = vector.broadcast %cst_35 : f32 to vector<8x8xf32>
    %86 = arith.addf %33, %85 : vector<8x8xf32>
    %87 = tpu.reciprocal %86 {approx = true} : vector<8x8xf32> -> vector<8x8xf32>
    %88 = arith.mulf %86, %87 : vector<8x8xf32>
    %cst_36 = arith.constant 2.000000e+00 : f32
    %89 = vector.broadcast %cst_36 : f32 to vector<8x8xf32>
    %90 = arith.subf %89, %88 : vector<8x8xf32>
    %91 = arith.mulf %87, %90 : vector<8x8xf32>
    %cst_37 = arith.constant -0.138571098 : f32
    %92 = vector.broadcast %cst_37 : f32 to vector<8x8xf32>
    %93 = arith.mulf %92, %91 : vector<8x8xf32>
    %94 = arith.addf %84, %93 : vector<8x8xf32>
    %cst_38 = arith.constant 7.000000e+00 : f32
    %95 = vector.broadcast %cst_38 : f32 to vector<8x8xf32>
    %96 = arith.addf %33, %95 : vector<8x8xf32>
    %97 = tpu.reciprocal %96 {approx = true} : vector<8x8xf32> -> vector<8x8xf32>
    %98 = arith.mulf %96, %97 : vector<8x8xf32>
    %cst_39 = arith.constant 2.000000e+00 : f32
    %99 = vector.broadcast %cst_39 : f32 to vector<8x8xf32>
    %100 = arith.subf %99, %98 : vector<8x8xf32>
    %101 = arith.mulf %97, %100 : vector<8x8xf32>
    %cst_40 = arith.constant 9.98436917E-6 : f32
    %102 = vector.broadcast %cst_40 : f32 to vector<8x8xf32>
    %103 = arith.mulf %102, %101 : vector<8x8xf32>
    %104 = arith.addf %94, %103 : vector<8x8xf32>
    %cst_41 = arith.constant 8.000000e+00 : f32
    %105 = vector.broadcast %cst_41 : f32 to vector<8x8xf32>
    %106 = arith.addf %33, %105 : vector<8x8xf32>
    %107 = tpu.reciprocal %106 {approx = true} : vector<8x8xf32> -> vector<8x8xf32>
    %108 = arith.mulf %106, %107 : vector<8x8xf32>
    %cst_42 = arith.constant 2.000000e+00 : f32
    %109 = vector.broadcast %cst_42 : f32 to vector<8x8xf32>
    %110 = arith.subf %109, %108 : vector<8x8xf32>
    %111 = arith.mulf %107, %110 : vector<8x8xf32>
    %cst_43 = arith.constant 1.50563267E-7 : f32
    %112 = vector.broadcast %cst_43 : f32 to vector<8x8xf32>
    %113 = arith.mulf %112, %111 : vector<8x8xf32>
    %114 = arith.addf %104, %113 : vector<8x8xf32>
    %cst_44 = arith.constant 7.000000e+00 : f32
    %115 = vector.broadcast %cst_44 : f32 to vector<8x8xf32>
    %116 = arith.addf %33, %115 : vector<8x8xf32>
    %cst_45 = arith.constant 5.000000e-01 : f32
    %117 = vector.broadcast %cst_45 : f32 to vector<8x8xf32>
    %118 = arith.addf %116, %117 : vector<8x8xf32>
    %cst_46 = arith.constant 5.000000e-01 : f32
    %119 = vector.broadcast %cst_46 : f32 to vector<8x8xf32>
    %120 = arith.addf %33, %119 : vector<8x8xf32>
    %121 = math.log %118 : vector<8x8xf32>
    %122 = arith.mulf %120, %121 : vector<8x8xf32>
    %cst_47 = arith.constant 0.918938517 : f32
    %123 = vector.broadcast %cst_47 : f32 to vector<8x8xf32>
    %124 = arith.addf %123, %122 : vector<8x8xf32>
    %125 = arith.subf %124, %118 : vector<8x8xf32>
    %126 = math.log %114 : vector<8x8xf32>
    %127 = arith.addf %125, %126 : vector<8x8xf32>
    %128 = arith.addf %31, %127 : vector<8x8xf32>
    %129 = arith.mulf %128, %29 : vector<8x8xf32>
    %130 = math.exp %129 : vector<8x8xf32>
    %c1_48 = arith.constant 1 : index
    %c0_49 = arith.constant 0 : index
    %c0_50 = arith.constant 0 : index
    %131 = vector.load %arg3[%c1_48, %c0_49, %c0_50] : memref<2x8x16xf32, #tpu.memory_space<vmem>>, vector<1x8x16xf32>
    %132 = vector.shape_cast %131 : vector<1x8x16xf32> to vector<8x16xf32>
    %cst_51 = arith.constant dense<0.000000e+00> : vector<8x16xf32>
    %133 = tpu.matmul %130, %132, %cst_51 {dimension_numbers = #tpu.dot_dimension_numbers<[1], [0], [0], [1], [0, 0, 1, 1], [], []>} : vector<8x8xf32>, vector<8x16xf32>, vector<8x16xf32> -> vector<8x16xf32>
    %134 = arith.addf %10, %133 : vector<8x16xf32>
    %135 = tpu.iota {dimensions = array<i32: 1>} : vector<8x16xi32>
    %c8_i32 = arith.constant 8 : i32
    %136 = vector.broadcast %c8_i32 : i32 to vector<8x16xi32>
    %137 = arith.cmpi slt, %135, %136 : vector<8x16xi32>
    %138 = arith.select %137, %23, %134 : vector<8x16xi1>, vector<8x16xf32>
    %c0_52 = arith.constant 0 : index
    %c0_53 = arith.constant 0 : index
    %139 = vector.load %arg4[%c0_52, %c0_53] : memref<8x16xf32, #tpu.memory_space<vmem>>, vector<8x16xf32>
    tpu.vector_store %arg4[%c0_52, %c0_53], %138 {strides = array<i32>} : memref<8x16xf32, #tpu.memory_space<vmem>>, vector<8x16xf32>,
    return
  }
}

</mosaic_0001>

<llo_original>
// kernel: text_cvae_forward.1
$region0: #{text_cvae_forward.1}
  #allocation0 [shape = 'u32[]', space=smem, size = 0x4, offset = 0x4, fixed_abs, tag = 'smem constant byte address 0x4 - core index']
  #allocation1 [shape = 'u32[144,128]{1,0:T(1,128)}', space=vmem, size = 0x12000, scoped, tag = 'internal scratch']
  %s0 = inlined_call_operand.vmem [shape: f32[8,33], index: 0, kind: input, shape index: {}]
  %s1 = inlined_call_operand.vmem [shape: f32[2,8,8], index: 1, kind: input, shape index: {}]
  %s2 = inlined_call_operand.vmem [shape: f32[33,16], index: 2, kind: input, shape index: {}]
  %s3 = inlined_call_operand.vmem [shape: f32[2,8,16], index: 3, kind: input, shape index: {}]
  %s4 = inlined_call_operand.vmem [shape: f32[8,16], index: 4, kind: output, shape index: {}]
  %s5 = sld [smem:[#allocation0]]
  $region26: #{text_cvae_forward.1} parent=0
    _
  %s7 = ssub.s32 1, %s5
  %s8 = scalar_select 0, %s7, %s5
  // Predicated region
  $region2: #{text_cvae_forward.1} parent=0 // pred_check
    _
  $region3: #{text_cvae_forward.1} parent=0 // pred_check_branch
    %10 = sbr.rel (0) target = $region5
  $region4: #{text_cvae_forward.1} parent=0 // pred_region
    _
  $region5: #{text_cvae_forward.1} parent=0 // pred_fallthru
    _
  // Predicated region
  $region6: #{text_cvae_forward.1} parent=0 // pred_check
    _
  $region7: #{text_cvae_forward.1} parent=0 // pred_check_branch
    %12 = sbr.rel (0) target = $region9
  $region8: #{text_cvae_forward.1} parent=0 // pred_region
    _
  $region9: #{text_cvae_forward.1} parent=0 // pred_fallthru
    _
  // Predicated region
  $region10: #{text_cvae_forward.1} parent=0 // pred_check
    _
  $region11: #{text_cvae_forward.1} parent=0 // pred_check_branch
    %14 = sbr.rel (0) target = $region13
  $region12: #{text_cvae_forward.1} parent=0 // pred_region
    _
  $region13: #{text_cvae_forward.1} parent=0 // pred_fallthru
    _
  // Predicated region
  $region14: #{text_cvae_forward.1} parent=0 // pred_check
    _
  $region15: #{text_cvae_forward.1} parent=0 // pred_check_branch
    %16 = sbr.rel (0) target = $region17
  $region16: #{text_cvae_forward.1} parent=0 // pred_region
    _
  $region17: #{text_cvae_forward.1} parent=0 // pred_fallthru
    _
  %v17 = vld [vmem:[%s0] sm:$0xff]
  %v18 = vld [vmem:[%s1] sm:$0xff]
  %s19 = scalar_lea.vmem %s1, 8
  %v20 = vld [vmem:[%s19] sm:$0xff]
  %v21 = vld [vmem:[%s2] sm:$0xff]
  %v22 = vld [vmem:[%s2 + $0x8] sm:$0xff]
  %v23 = vld [vmem:[%s2 + $0x10] sm:$0xff]
  %v24 = vld [vmem:[%s2 + $0x18] sm:$0xff]
  %v25 = vld [vmem:[%s2 + $0x20] sm:$0x1]
  %v26 = vld [vmem:[%s3] sm:$0xff]
  %vm27 = vcmask 64512
  %v29 = vsel %vm27, %v18, 0
  %31 = vmatprep.subr.mxu0 0.0
  %32 = vmatpush1.msra.mxu0 %v26
  %33 = vmatprep.subr.mxu0 0.0
  %34 = vmatpush1.msra.mxu0 0.0
  %35 = vmatprep.subr.mxu0 0.0
  %36 = vmatpush1.msra.mxu0 0.0
  %37 = vmatprep.subr.mxu0 0.0
  %38 = vmatpush1.msra.mxu0 0.0
  %39 = vmatprep.subr.mxu0 0.0
  %40 = vmatpush1.msra.mxu0 0.0
  %41 = vmatprep.subr.mxu0 0.0
  %42 = vmatpush1.msra.mxu0 0.0
  %43 = vmatprep.subr.mxu0 0.0
  %44 = vmatpush1.msra.mxu0 0.0
  %45 = vmatprep.subr.mxu0 0.0
  %46 = vmatpush1.msra.mxu0 0.0
  %47 = vmatprep.subr.mxu0 0.0
  %48 = vmatpush1.msra.mxu0 0.0
  %49 = vmatprep.subr.mxu0 0.0
  %50 = vmatpush1.msra.mxu0 0.0
  %51 = vmatprep.subr.mxu0 0.0
  %52 = vmatpush1.msra.mxu0 0.0
  %53 = vmatprep.subr.mxu0 0.0
  %54 = vmatpush1.msra.mxu0 0.0
  %55 = vmatprep.subr.mxu0 0.0
  %56 = vmatpush1.msra.mxu0 0.0
  %57 = vmatprep.subr.mxu0 0.0
  %58 = vmatpush1.msra.mxu0 0.0
  %59 = vmatprep.subr.mxu0 0.0
  %60 = vmatpush1.msra.mxu0 0.0
  %61 = vmatprep.subr.mxu0 0.0
  %62 = vmatpush1.msra.mxu0 0.0
  %63 = vmatprep.subr.mxu0 0.0
  %64 = vmatpush1.msra.mxu0 0.0
  %65 = vmatprep.subr.mxu0 0.0
  %66 = vmatpush1.msra.mxu0 0.0
  %67 = vmatprep.subr.mxu0 0.0
  %68 = vmatpush1.msra.mxu0 0.0
  %69 = vmatprep.subr.mxu0 0.0
  %70 = vmatpush1.msra.mxu0 0.0
  %71 = vmatprep.subr.mxu0 0.0
  %72 = vmatpush1.msra.mxu0 0.0
  %73 = vmatprep.subr.mxu0 0.0
  %74 = vmatpush1.msra.mxu0 0.0
  %75 = vmatprep.subr.mxu0 0.0
  %76 = vmatpush1.msra.mxu0 0.0
  %77 = vmatprep.subr.mxu0 0.0
  %78 = vmatpush1.msra.mxu0 0.0
  %79 = vmatprep.subr.mxu0 0.0
  %80 = vmatpush1.msra.mxu0 0.0
  %81 = vmatprep.subr.mxu0 0.0
  %82 = vmatpush1.msra.mxu0 0.0
  %83 = vmatprep.subr.mxu0 0.0
  %84 = vmatpush1.msra.mxu0 0.0
  %85 = vmatprep.subr.mxu0 0.0
  %86 = vmatpush1.msra.mxu0 0.0
  %87 = vmatprep.subr.mxu0 0.0
  %88 = vmatpush1.msra.mxu0 0.0
  %89 = vmatprep.subr.mxu0 0.0
  %90 = vmatpush1.msra.mxu0 0.0
  %91 = vmatprep.subr.mxu0 0.0
  %92 = vmatpush1.msra.mxu0 0.0
  %93 = vmatprep.subr.mxu0 0.0
  %94 = vmatpush1.msra.mxu0 0.0
  %95 = vmatprep.mubr.f32.mxu0 0.0
  %96 = vmatmul.mubr.f32.gmra.mrb[0].mxu0 %v29
  %v97 = vpop.f32.mrb[0].mxu0
  %v98 = vadd.f32 0.0, %v97
  %v99 = vpop.f32.mrb[0].mxu0
  %100 = vdwg.mxu0
  %vm101 = vcmask 269312
  %v103 = vsel %vm101, %v17, 0
  %vm105 = vcmask 1040384
  %v107 = vsel %vm105, %v25, 0
  %109 = vmatprep.subr.mxu0 0.0
  %110 = vmatpush1.msra.mxu0 %v21
  %111 = vmatprep.subr.mxu0 0.0
  %112 = vmatpush1.msra.mxu0 %v22
  %113 = vmatprep.subr.mxu0 0.0
  %114 = vmatpush1.msra.mxu0 %v23
  %115 = vmatprep.subr.mxu0 0.0
  %116 = vmatpush1.msra.mxu0 %v24
  %117 = vmatprep.subr.mxu0 0.0
  %118 = vmatpush1.msra.mxu0 %v107
  %119 = vmatprep.subr.mxu0 0.0
  %120 = vmatpush1.msra.mxu0 0.0
  %121 = vmatprep.subr.mxu0 0.0
  %122 = vmatpush1.msra.mxu0 0.0
  %123 = vmatprep.subr.mxu0 0.0
  %124 = vmatpush1.msra.mxu0 0.0
  %125 = vmatprep.subr.mxu0 0.0
  %126 = vmatpush1.msra.mxu0 0.0
  %127 = vmatprep.subr.mxu0 0.0
  %128 = vmatpush1.msra.mxu0 0.0
  %129 = vmatprep.subr.mxu0 0.0
  %130 = vmatpush1.msra.mxu0 0.0
  %131 = vmatprep.subr.mxu0 0.0
  %132 = vmatpush1.msra.mxu0 0.0
  %133 = vmatprep.subr.mxu0 0.0
  %134 = vmatpush1.msra.mxu0 0.0
  %135 = vmatprep.subr.mxu0 0.0
  %136 = vmatpush1.msra.mxu0 0.0
  %137 = vmatprep.subr.mxu0 0.0
  %138 = vmatpush1.msra.mxu0 0.0
  %139 = vmatprep.subr.mxu0 0.0
  %140 = vmatpush1.msra.mxu0 0.0
  %141 = vmatprep.subr.mxu0 0.0
  %142 = vmatpush1.msra.mxu0 0.0
  %143 = vmatprep.subr.mxu0 0.0
  %144 = vmatpush1.msra.mxu0 0.0
  %145 = vmatprep.subr.mxu0 0.0
  %146 = vmatpush1.msra.mxu0 0.0
  %147 = vmatprep.subr.mxu0 0.0
  %148 = vmatpush1.msra.mxu0 0.0
  %149 = vmatprep.subr.mxu0 0.0
  %150 = vmatpush1.msra.mxu0 0.0
  %151 = vmatprep.subr.mxu0 0.0
  %152 = vmatpush1.msra.mxu0 0.0
  %153 = vmatprep.subr.mxu0 0.0
  %154 = vmatpush1.msra.mxu0 0.0
  %155 = vmatprep.subr.mxu0 0.0
  %156 = vmatpush1.msra.mxu0 0.0
  %157 = vmatprep.subr.mxu0 0.0
  %158 = vmatpush1.msra.mxu0 0.0
  %159 = vmatprep.subr.mxu0 0.0
  %160 = vmatpush1.msra.mxu0 0.0
  %161 = vmatprep.subr.mxu0 0.0
  %162 = vmatpush1.msra.mxu0 0.0
  %163 = vmatprep.subr.mxu0 0.0
  %164 = vmatpush1.msra.mxu0 0.0
  %165 = vmatprep.subr.mxu0 0.0
  %166 = vmatpush1.msra.mxu0 0.0
  %167 = vmatprep.subr.mxu0 0.0
  %168 = vmatpush1.msra.mxu0 0.0
  %169 = vmatprep.subr.mxu0 0.0
  %170 = vmatpush1.msra.mxu0 0.0
  %171 = vmatprep.subr.mxu0 0.0
  %172 = vmatpush1.msra.mxu0 0.0
  %173 = vmatprep.mubr.f32.mxu0 0.0
  %174 = vmatmul.mubr.f32.gmra.mrb[0].mxu0 %v103
  %v175 = vpop.f32.mrb[0].mxu0
  %v176 = vadd.f32 %v98, %v175
  %v177 = vpop.f32.mrb[0].mxu0
  %178 = vdwg.mxu0
  %v179 = vmin.f32 %v176, 20.0
  %v180 = vmul.f32 %v179, 1.442695
  %v181 = vpow.pop %v180
  %v182 = vadd.f32 %v181, 1.0
  %v183 = vlog2.pop %v182
  %v184 = vmul.f32 %v183, 0.6931472
  %vm185 = vcmp.gt.f32.partialorder %v176, 20.0
  %v186 = vsel %vm185, %v176, %v184
  %v187 = vadd.f32 %v186, 1.125
  %v188 = vrcp.pop %v187
  %v189 = vmul.f32 %v187, %v188
  %v190 = vsub.f32 2.0, %v189
  %v191 = vmul.f32 %v188, %v190
  %v192 = vmul.f32 %v20, %v187
  %v193 = vlog2.pop %v192
  %v194 = vmul.f32 %v193, 0.6931472
  %v195 = vsub.f32 %v187, 1.0
  %v196 = vadd.f32 %v195, 1.0
  %v197 = vrcp.pop %v196
  %v198 = vmul.f32 %v196, %v197
  %v199 = vsub.f32 2.0, %v198
  %v200 = vmul.f32 %v197, %v199
  %v201 = vmul.f32 %v200, 676.5204
  %v202 = vadd.f32 %v201, 1.0
  %v203 = vadd.f32 %v195, 2.0
  %v204 = vrcp.pop %v203
  %v205 = vmul.f32 %v203, %v204
  %v206 = vsub.f32 2.0, %v205
  %v207 = vmul.f32 %v204, %v206
  %v208 = vmul.f32 %v207, -1259.1392
  %v209 = vadd.f32 %v202, %v208
  %v210 = vadd.f32 %v195, 3.0
  %v211 = vrcp.pop %v210
  %v212 = vmul.f32 %v210, %v211
  %v213 = vsub.f32 2.0, %v212
  %v214 = vmul.f32 %v211, %v213
  %v215 = vmul.f32 %v214, 771.3234
  %v216 = vadd.f32 %v209, %v215
  %v217 = vadd.f32 %v195, 4.0
  %v218 = vrcp.pop %v217
  %v219 = vmul.f32 %v217, %v218
  %v220 = vsub.f32 2.0, %v219
  %v221 = vmul.f32 %v218, %v220
  %v222 = vmul.f32 %v221, -176.61504
  %v223 = vadd.f32 %v216, %v222
  %v224 = vadd.f32 %v195, 5.0
  %v225 = vrcp.pop %v224
  %v226 = vmul.f32 %v224, %v225
  %v227 = vsub.f32 2.0, %v226
  %v228 = vmul.f32 %v225, %v227
  %v229 = vmul.f32 %v228, 12.507343
  %v230 = vadd.f32 %v223, %v229
  %v231 = vadd.f32 %v195, 6.0
  %v232 = vrcp.pop %v231
  %v233 = vmul.f32 %v231, %v232
  %v234 = vsub.f32 2.0, %v233
  %v235 = vmul.f32 %v232, %v234
  %v236 = vmul.f32 %v235, -0.1385711
  %v237 = vadd.f32 %v230, %v236
  %v238 = vadd.f32 %v195, 7.0
  %v239 = vrcp.pop %v238
  %v240 = vmul.f32 %v238, %v239
  %v241 = vsub.f32 2.0, %v240
  %v242 = vmul.f32 %v239, %v241
  %v243 = vmul.f32 %v242, 9.984369e-06
  %v244 = vadd.f32 %v237, %v243
  %v245 = vadd.f32 %v195, 8.0
  %v246 = vrcp.pop %v245
  %v247 = vmul.f32 %v245, %v246
  %v248 = vsub.f32 2.0, %v247
  %v249 = vmul.f32 %v246, %v248
  %v250 = vmul.f32 %v249, 1.5056327e-07
  %v251 = vadd.f32 %v244, %v250
  %v252 = vadd.f32 %v238, 0.5
  %v253 = vadd.f32 %v195, 0.5
  %v254 = vlog2.pop %v252
  %v255 = vmul.f32 %v254, 0.6931472
  %v256 = vmul.f32 %v253, %v255
  %v257 = vadd.f32 %v256, 0.9189385
  %v258 = vsub.f32 %v257, %v252
  %v259 = vlog2.pop %v251
  %v260 = vmul.f32 %v259, 0.6931472
  %v261 = vadd.f32 %v258, %v260
  %v262 = vadd.f32 %v194, %v261
  %v263 = vmul.f32 %v262, %v191
  %v264 = vmul.f32 %v263, 1.442695
  %v265 = vpow.pop %v264
  %s266 = scalar_lea.vmem %s3, 8
  %v267 = vld [vmem:[%s266] sm:$0xff]
  %v269 = vsel %vm27, %v265, 0
  %271 = vmatprep.subr.mxu0 0.0
  %272 = vmatpush1.msra.mxu0 %v267
  %273 = vmatprep.subr.mxu0 0.0
  %274 = vmatpush1.msra.mxu0 0.0
  %275 = vmatprep.subr.mxu0 0.0
  %276 = vmatpush1.msra.mxu0 0.0
  %277 = vmatprep.subr.mxu0 0.0
  %278 = vmatpush1.msra.mxu0 0.0
  %279 = vmatprep.subr.mxu0 0.0
  %280 = vmatpush1.msra.mxu0 0.0
  %281 = vmatprep.subr.mxu0 0.0
  %282 = vmatpush1.msra.mxu0 0.0
  %283 = vmatprep.subr.mxu0 0.0
  %284 = vmatpush1.msra.mxu0 0.0
  %285 = vmatprep.subr.mxu0 0.0
  %286 = vmatpush1.msra.mxu0 0.0
  %287 = vmatprep.subr.mxu0 0.0
  %288 = vmatpush1.msra.mxu0 0.0
  %289 = vmatprep.subr.mxu0 0.0
  %290 = vmatpush1.msra.mxu0 0.0
  %291 = vmatprep.subr.mxu0 0.0
  %292 = vmatpush1.msra.mxu0 0.0
  %293 = vmatprep.subr.mxu0 0.0
  %294 = vmatpush1.msra.mxu0 0.0
  %295 = vmatprep.subr.mxu0 0.0
  %296 = vmatpush1.msra.mxu0 0.0
  %297 = vmatprep.subr.mxu0 0.0
  %298 = vmatpush1.msra.mxu0 0.0
  %299 = vmatprep.subr.mxu0 0.0
  %300 = vmatpush1.msra.mxu0 0.0
  %301 = vmatprep.subr.mxu0 0.0
  %302 = vmatpush1.msra.mxu0 0.0
  %303 = vmatprep.subr.mxu0 0.0
  %304 = vmatpush1.msra.mxu0 0.0
  %305 = vmatprep.subr.mxu0 0.0
  %306 = vmatpush1.msra.mxu0 0.0
  %307 = vmatprep.subr.mxu0 0.0
  %308 = vmatpush1.msra.mxu0 0.0
  %309 = vmatprep.subr.mxu0 0.0
  %310 = vmatpush1.msra.mxu0 0.0
  %311 = vmatprep.subr.mxu0 0.0
  %312 = vmatpush1.msra.mxu0 0.0
  %313 = vmatprep.subr.mxu0 0.0
  %314 = vmatpush1.msra.mxu0 0.0
  %315 = vmatprep.subr.mxu0 0.0
  %316 = vmatpush1.msra.mxu0 0.0
  %317 = vmatprep.subr.mxu0 0.0
  %318 = vmatpush1.msra.mxu0 0.0
  %319 = vmatprep.subr.mxu0 0.0
  %320 = vmatpush1.msra.mxu0 0.0
  %321 = vmatprep.subr.mxu0 0.0
  %322 = vmatpush1.msra.mxu0 0.0
  %323 = vmatprep.subr.mxu0 0.0
  %324 = vmatpush1.msra.mxu0 0.0
  %325 = vmatprep.subr.mxu0 0.0
  %326 = vmatpush1.msra.mxu0 0.0
  %327 = vmatprep.subr.mxu0 0.0
  %328 = vmatpush1.msra.mxu0 0.0
  %329 = vmatprep.subr.mxu0 0.0
  %330 = vmatpush1.msra.mxu0 0.0
  %331 = vmatprep.subr.mxu0 0.0
  %332 = vmatpush1.msra.mxu0 0.0
  %333 = vmatprep.subr.mxu0 0.0
  %334 = vmatpush1.msra.mxu0 0.0
  %335 = vmatprep.mubr.f32.mxu0 0.0
  %336 = vmatmul.mubr.f32.gmra.mrb[0].mxu0 %v269
  %v337 = vpop.f32.mrb[0].mxu0
  %v338 = vadd.f32 0.0, %v337
  %v339 = vpop.f32.mrb[0].mxu0
  %340 = vdwg.mxu0
  %v341 = vadd.f32 %v176, %v338
  %v342 = vlaneseq
  %v343 = vand.u32 %v342, 127
  %vm344 = vcmp.lt.s32.totalorder %v343, 8
  %v345 = vsel %vm344, %v187, %v341
  %vm346 = vcmask 130048
  %347 = vst.msk [vmem:[%s4] sm:$0xff] %vm346, %v345
  // Predicated region
  $region18: #{text_cvae_forward.1} parent=0 // pred_check
    _
  $region19: #{text_cvae_forward.1} parent=0 // pred_check_branch
    %349 = sbr.rel (0) target = $region21
  $region20: #{text_cvae_forward.1} parent=0 // pred_region
    _
  $region21: #{text_cvae_forward.1} parent=0 // pred_fallthru
    _
  // Predicated region
  $region22: #{text_cvae_forward.1} parent=0 // pred_check
    _
  $region23: #{text_cvae_forward.1} parent=0 // pred_check_branch
    %351 = sbr.rel (0) target = $region25
  $region24: #{text_cvae_forward.1} parent=0 // pred_region
    _
  $region25: #{text_cvae_forward.1} parent=0 // pred_fallthru
    _

</llo_original>
